<compile_context>
chip_gen: v6e
topology: v6e:2x2x1
jax: 0.10.0
libtpu: 0.0.40
codegen_flags: <defaults>
</compile_context>

<pallas_src>
import jax
import jax.numpy as jnp
from jax.experimental import pallas as pl
from jax.experimental.pallas import tpu as pltpu


def _binary_sigmoid_kernel(x_ref, o_ref):
    x = x_ref[...]
    # f32 math for accuracy (v5e has no bf16 EUP path) and exact parity with
    # the PyTorch forward; jnp.round is half-to-even, matching torch.round.
    y = jax.nn.sigmoid(x.astype(jnp.float32))
    o_ref[...] = jnp.round(y).astype(o_ref.dtype)


def _round_up(a, b):
    return ((a + b - 1) // b) * b


def _binary_sigmoid_2d(x2d, *, target_block_bytes, force_two_steps):
    """Run the kernel over a lane-dense (R, C) slab (C a multiple of 128)."""
    R, C = x2d.shape
    itemsize = jnp.dtype(x2d.dtype).itemsize
    # Sublane packing multiple: 8 rows for 4-byte, 16 for 2-byte, 32 for 1-byte.
    sub_mult = max(8, 32 // min(itemsize, 4))

    rows_target = max(sub_mult, target_block_bytes // (C * itemsize))
    num_blocks = pl.cdiv(R, rows_target)
    if force_two_steps and R >= 2 * sub_mult:
        # >= 2 grid steps so megacore sharding has work for both TCs on v7x.
        num_blocks = max(num_blocks, 2)

    # Balanced split, rounded up to the sublane packing multiple.
    tile_rows = _round_up(pl.cdiv(R, num_blocks), sub_mult)
    if tile_rows >= R:
        tile_rows = R  # single full-extent block: always a legal block shape
    grid = (pl.cdiv(R, tile_rows),)

    return pl.pallas_call(
        _binary_sigmoid_kernel,
        out_shape=jax.ShapeDtypeStruct((R, C), x2d.dtype),
        grid=grid,
        in_specs=[pl.BlockSpec((tile_rows, C), lambda i: (i, 0))],
        out_specs=pl.BlockSpec((tile_rows, C), lambda i: (i, 0)),
        compiler_params=pltpu.CompilerParams(
            dimension_semantics=("parallel",),
            vmem_limit_bytes=48 << 20,
        ),
    )(x2d)


def binary_sigmoid(x, *, target_block_bytes=4 << 20):
    """Forward of BinarySigmoid: round(sigmoid(x)). Elementwise, any shape."""
    orig_shape = x.shape
    orig_dtype = x.dtype
    n = x.size
    if n == 0:
        return x

    x_flat = jnp.ravel(x)
    n_aligned = (n // 128) * 128          # 128-aligned prefix handled by kernel
    tail = n - n_aligned                  # < 128 leftover elements

    pieces = []
    if n_aligned > 0:
        # Widest lane count (multiple of 128) that divides the aligned prefix
        # -> lane-dense slab, zero-copy reshape, wide unmasked vector stores.
        C = 128
        for cand in (4096, 2048, 1024, 512, 256):
            if n_aligned % cand == 0:
                C = cand
                break
        R = n_aligned // C
        itemsize = jnp.dtype(orig_dtype).itemsize
        force_two_steps = (n_aligned * itemsize) >= (1 << 20)

        prefix = x_flat if tail == 0 else x_flat[:n_aligned]
        out2d = _binary_sigmoid_2d(
            prefix.reshape(R, C),
            target_block_bytes=target_block_bytes,
            force_two_steps=force_two_steps,
        )
        pieces.append(out2d.reshape(-1))

    if tail > 0:
        # Tiny (<128 element) tail: plain jnp, avoids the old pad+slice copies.
        t = x_flat[n_aligned:]
        pieces.append(
            jnp.round(jax.nn.sigmoid(t.astype(jnp.float32))).astype(orig_dtype)
        )

    out_flat = pieces[0] if len(pieces) == 1 else jnp.concatenate(pieces)
    return out_flat.reshape(orig_shape)


if __name__ == "__main__":
    key = jax.random.PRNGKey(0)
    # NCHW input, small shape: batch=2, channels=4, spatial=16x16
    x = jax.random.normal(key, (2, 4, 16, 16), dtype=jnp.float32) * 3.0

    out = jax.block_until_ready(binary_sigmoid(x))

    # Reference check in plain JAX (forward value of the PyTorch module).
    ref = jnp.round(jax.nn.sigmoid(x))
    assert out.shape == x.shape
    assert out.dtype == x.dtype
    assert bool(jnp.all(out == ref))

    print("KERNEL_OK")
</pallas_src>

<mosaic_0001>
module attributes {stable_mosaic.version = 11 : i64} {
  func.func @_binary_sigmoid_kernel(%arg0: i32, %arg1: memref<1x2048xf32, #tpu.memory_space<vmem>>, %arg2: memref<1x2048xf32, #tpu.memory_space<vmem>>) attributes {dimension_semantics = [#tpu.dimension_semantics<parallel>], iteration_bounds = array<i64: 1>, scalar_prefetch = 0 : i64, scratch_operands = 0 : i64, tpu.core_type = #tpu.core_type<tc>, window_params = [{transform_indices = @transform_0, window_bounds = array<i64: 1, 2048>}, {transform_indices = @transform_1, window_bounds = array<i64: 1, 2048>}]} {
    %c0 = arith.constant 0 : index
    %c0_0 = arith.constant 0 : index
    %0 = vector.load %arg1[%c0, %c0_0] : memref<1x2048xf32, #tpu.memory_space<vmem>>, vector<1x2048xf32>
    %1 = arith.negf %0 : vector<1x2048xf32>
    %2 = math.exp %1 : vector<1x2048xf32>
    %cst = arith.constant 1.000000e+00 : f32
    %3 = vector.broadcast %cst : f32 to vector<1x2048xf32>
    %4 = arith.addf %3, %2 : vector<1x2048xf32>
    %5 = arith.divf %3, %4 : vector<1x2048xf32>
    %6 = math.roundeven %5 : vector<1x2048xf32>
    %c0_1 = arith.constant 0 : index
    %c0_2 = arith.constant 0 : index
    %7 = vector.load %arg2[%c0_1, %c0_2] : memref<1x2048xf32, #tpu.memory_space<vmem>>, vector<1x2048xf32>
    tpu.vector_store %arg2[%c0_1, %c0_2], %6 {strides = array<i32>} : memref<1x2048xf32, #tpu.memory_space<vmem>>, vector<1x2048xf32>,
    return
  }
  func.func @transform_0(%arg0: i32) -> (i32, i32) {
    %c0_i32 = arith.constant 0 : i32
    %c0_i32_0 = arith.constant 0 : i32
    return %arg0, %c0_i32 : i32, i32
  }
  func.func @transform_1(%arg0: i32) -> (i32, i32) {
    %c0_i32 = arith.constant 0 : i32
    %c0_i32_0 = arith.constant 0 : i32
    return %arg0, %c0_i32 : i32, i32
  }
}

</mosaic_0001>

<llo_original>
// kernel: tpu_custom_call.1
$region0: #{tpu_custom_call.1}
  #allocation0 [shape = 'u32[]', space=smem, size = 0x4, offset = 0x4, fixed_abs, tag = 'smem constant byte address 0x4 - core index']
  #allocation1 [shape = 'u32[144,128]{1,0:T(1,128)}', space=vmem, size = 0x12000, scoped, tag = 'internal scratch']
  %s0 = inlined_call_operand.hbm [shape: f32[1,2048], index: 0, kind: input, shape index: {}]
  %s1 = inlined_call_operand.hbm [shape: f32[1,2048], index: 1, kind: output, shape index: {}]
  %s2 = sld [smem:[#allocation0]]
  $region18: #{tpu_custom_call.1} parent=0
    _
  %s4 = ssub.s32 1, %s2
  %s5 = scalar_select 0, %s4, %s2
  $region1: #{tpu_custom_call.1} parent=0
    #allocation2 [shape = 'u8[8192]{0}', space=vmem, size = 0x2000, scoped, tag = 'input window, operand 0, single buffered']
    #allocation3 [shape = 's32[1]{0}', space=sflag, size = 0x4, scoped, tag = 'scoped memory for tpu_custom_call.1']
    #allocation4 [shape = 's32[1]{0}', space=sflag, size = 0x4, scoped, tag = 'scoped memory for tpu_custom_call.1']
    #allocation5 [shape = 'u8[8192]{0}', space=vmem, size = 0x2000, scoped, tag = 'output window, operand 0, single buffered']
    %6 = vsyncpa [#allocation3], 0
    %7 = vsyncpa [#allocation4], 0
    // Predicated region
    $region2: #{tpu_custom_call.1} parent=1 // pred_check
      _
    $region3: #{tpu_custom_call.1} parent=1 // pred_check_branch
      %9 = sbr.rel (0) target = $region5
    $region4: #{tpu_custom_call.1} parent=1 // pred_region
      %s11 = ssub.s32 256, 256
      %12 = vsyncadd [#allocation3], %s11
      %s14 = sshll.u32 [#allocation2], 4
      %s15 = int_to_ptr.vmem [resolvable:$true] %s14
      %17 = dma.hbm_to_vmem [thread:$0]  %s0, 256, %s15, [#allocation3]
    $region5: #{tpu_custom_call.1} parent=1 // pred_fallthru
      _
    // Predicated region
    $region6: #{tpu_custom_call.1} parent=1 // pred_check
      _
    $region7: #{tpu_custom_call.1} parent=1 // pred_check_branch
      %19 = sbr.rel (0) target = $region9
    $region8: #{tpu_custom_call.1} parent=1 // pred_region
      %20 = dma.done [#allocation3], 256
    $region9: #{tpu_custom_call.1} parent=1 // pred_fallthru
      _
    %v21 = vld [vmem:[#allocation2] sm:$0xff]
    %v22 = vld [vmem:[#allocation2 + $0x8] sm:$0xff]
    %v23 = vxor.u32 %v21, 2147483648
    %v24 = vxor.u32 %v22, 2147483648
    %v25 = vmul.f32 %v23, 1.442695
    %v26 = vpow.pop %v25
    %v27 = vmul.f32 %v24, 1.442695
    %v28 = vpow.pop %v27
    %v29 = vadd.f32 %v26, 1.0
    %v30 = vadd.f32 %v28, 1.0
    %v31 = vrcp.pop %v29
    %v32 = vmul.f32 1.0, %v31
    %v33 = vrcp.pop %v30
    %v34 = vmul.f32 1.0, %v33
    %v35 = vround.ne.pseudo %v32
    %v36 = vround.ne.pseudo %v34
    %37 = vst [vmem:[#allocation5] sm:$0xff] %v35
    %38 = vst [vmem:[#allocation5 + $0x8] sm:$0xff] %v36
    // Predicated region
    $region10: #{tpu_custom_call.1} parent=1 // pred_check
      _
    $region11: #{tpu_custom_call.1} parent=1 // pred_check_branch
      %40 = sbr.rel (0) target = $region13
    $region12: #{tpu_custom_call.1} parent=1 // pred_region
      %s42 = ssub.s32 256, 256
      %43 = vsyncadd [#allocation4], %s42
      %s45 = sshll.u32 [#allocation5], 4
      %s46 = int_to_ptr.vmem [resolvable:$true] %s45
      %48 = dma.vmem_to_hbm [thread:$0]  %s46, 256, %s1, [#allocation4]
    $region13: #{tpu_custom_call.1} parent=1 // pred_fallthru
      _
    // Predicated region
    $region14: #{tpu_custom_call.1} parent=1 // pred_check
      _
    $region15: #{tpu_custom_call.1} parent=1 // pred_check_branch
      %50 = sbr.rel (0) target = $region17
    $region16: #{tpu_custom_call.1} parent=1 // pred_region
      %51 = dma.done [#allocation4], 256
    $region17: #{tpu_custom_call.1} parent=1 // pred_fallthru
      _
    %52 = vsyncpa [#allocation3], 1
    %53 = vsyncpa [#allocation4], 1

</llo_original>
